<compile_context>
chip_gen: v6e
topology: v6e:2x2x1
jax: 0.10.0
libtpu: 0.0.40
codegen_flags: <defaults>
</compile_context>

<pallas_src>
import jax
import jax.numpy as jnp
from jax.experimental import pallas as pl
from jax.experimental.pallas import tpu as pltpu

EPS = 1e-5        # PyTorch InstanceNorm1d default eps
NC_PAD = 128      # lane-dense classifier output width


def _round_up(n, m):
    return ((n + m - 1) // m) * m


def _cytokine_kernel(x_ref, w1_ref, b1_ref, w2_ref, b2_ref,
                     w3_ref, b3_ref, w4_ref, b4_ref, out_ref):
    def linear(h, w_ref, b_ref):
        return jnp.dot(h, w_ref[...],
                       preferred_element_type=jnp.float32) + b_ref[...]

    def relu_instnorm(h):
        h = jnp.maximum(h, 0.0)                                   # ReLU
        inv_f = jnp.float32(1.0 / h.shape[-1])
        s1 = jnp.sum(h, axis=-1, keepdims=True)                   # one pass:
        s2 = jnp.sum(h * h, axis=-1, keepdims=True)               #   sum, sum of squares
        mu = s1 * inv_f
        var = jnp.maximum(s2 * inv_f - mu * mu, 0.0)              # biased variance
        return (h - mu) * jax.lax.rsqrt(var + EPS)                # InstanceNorm1d (no affine)
        # TODO(synk): Dropout(0.3) omitted (identity in eval mode).

    x = x_ref[...].astype(jnp.float32)
    h = relu_instnorm(linear(x, w1_ref, b1_ref))   # Linear(input_size,128)+ReLU+IN
    h = relu_instnorm(linear(h, w2_ref, b2_ref))   # Linear(128,64)+ReLU+IN
    h = relu_instnorm(linear(h, w3_ref, b3_ref))   # Linear(64,32)+ReLU+IN
    out_ref[...] = linear(h, w4_ref, b4_ref).astype(out_ref.dtype)  # classifier (padded to 128 lanes)


def cytokine_branch(x, params, *, tm=None):
    """params: list of (W (in,out), b (1,out) or (out,)) for the 4 Linear layers."""
    (w1, b1), (w2, b2), (w3, b3), (w4, b4) = params
    B, d_in = x.shape
    nc = w4.shape[1]

    # Lane-dense classifier: zero-pad to 128 output columns (padding columns are
    # exactly zero, so sliced logits are bit-identical).
    w4p = jnp.zeros((w4.shape[0], NC_PAD), w4.dtype).at[:, :nc].set(w4)
    b4p = jnp.zeros((1, NC_PAD), jnp.float32).at[:, :nc].set(
        jnp.reshape(b4, (1, nc)).astype(jnp.float32))

    def as_row(b):
        return jnp.reshape(b, (1, -1)).astype(jnp.float32)
    b1r, b2r, b3r = as_row(b1), as_row(b2), as_row(b3)

    # Row-tile selection: big tiles to amortize the ~0.35us/step grid overhead
    # and fill the MXU M dimension, but keep >= 2 grid steps so v7x's two
    # TensorCores both get work under dimension_semantics=("parallel",).
    if tm is None:
        tm = min(_round_up(B, 8), 512)
        if pl.cdiv(B, tm) == 1 and B > 8:
            half = _round_up(pl.cdiv(B, 2), 8)
            if half >= 8:
                tm = half
    grid_m = pl.cdiv(B, tm)
    b_pad = grid_m * tm

    # Zero-pad the batch instead of asserting B % tm == 0; pad rows are finite
    # (eps keeps rsqrt bounded) and are sliced off below.
    if b_pad != B:
        x_in = jnp.zeros((b_pad, d_in), x.dtype).at[:B, :].set(x)
    else:
        x_in = x

    def full(a):  # whole (small) parameter resident in VMEM every grid step
        return pl.BlockSpec(a.shape, lambda i: (0, 0))

    n_w_elems = (w1.size + b1r.size + w2.size + b2r.size
                 + w3.size + b3r.size + w4p.size + b4p.size)
    cost = pl.CostEstimate(
        flops=2 * b_pad * (d_in * 128 + 128 * 64 + 64 * 32 + 32 * NC_PAD),
        transcendentals=3 * b_pad,                       # one rsqrt per row per norm
        bytes_accessed=4 * (b_pad * d_in + b_pad * NC_PAD + n_w_elems),
    )

    out = pl.pallas_call(
        _cytokine_kernel,
        out_shape=jax.ShapeDtypeStruct((b_pad, NC_PAD), jnp.float32),
        grid_spec=pltpu.PrefetchScalarGridSpec(
            num_scalar_prefetch=0,
            grid=(grid_m,),
            in_specs=[
                pl.BlockSpec((tm, d_in), lambda i: (i, 0)),  # x tile (rows)
                full(w1), full(b1r),
                full(w2), full(b2r),
                full(w3), full(b3r),
                full(w4p), full(b4p),
            ],
            out_specs=pl.BlockSpec((tm, NC_PAD), lambda i: (i, 0)),
        ),
        compiler_params=pltpu.CompilerParams(
            dimension_semantics=("parallel",)),
        cost_estimate=cost,
    )(x_in, w1, b1r, w2, b2r, w3, b3r, w4p, b4p)

    return out[:B, :nc]


def _reference(x, params):
    """Pure-JAX reference of the PyTorch forward (eval mode)."""
    def relu_in(h):
        h = jnp.maximum(h, 0.0)
        mu = jnp.mean(h, axis=-1, keepdims=True)
        var = jnp.mean((h - mu) ** 2, axis=-1, keepdims=True)
        return (h - mu) / jnp.sqrt(var + EPS)

    (w1, b1), (w2, b2), (w3, b3), (w4, b4) = params
    h = relu_in(x @ w1 + b1)
    h = relu_in(h @ w2 + b2)
    h = relu_in(h @ w3 + b3)
    return h @ w4 + b4


if __name__ == "__main__":
    key = jax.random.PRNGKey(0)
    B, input_size, num_classes = 16, 32, 3

    layer_dims = [(input_size, 128), (128, 64), (64, 32), (32, num_classes)]
    keys = jax.random.split(key, 1 + 2 * len(layer_dims))

    x = jax.random.normal(keys[0], (B, input_size), dtype=jnp.float32)

    params = []
    for li, (din, dout) in enumerate(layer_dims):
        wk, bk = keys[1 + 2 * li], keys[2 + 2 * li]
        w = jax.random.normal(wk, (din, dout), dtype=jnp.float32) / jnp.sqrt(
            jnp.float32(din))
        b = 0.01 * jax.random.normal(bk, (1, dout), dtype=jnp.float32)
        params.append((w, b))

    out = cytokine_branch(x, params)
    jax.block_until_ready(out)

    ref = _reference(x, params)
    assert out.shape == (B, num_classes)
    assert jnp.allclose(out, ref, atol=1e-4, rtol=1e-4), "mismatch vs reference"

    # Also exercise a non-multiple-of-tile batch to cover the padding path.
    B2 = 13
    x2 = jax.random.normal(jax.random.PRNGKey(1), (B2, input_size), jnp.float32)
    out2 = cytokine_branch(x2, params)
    jax.block_until_ready(out2)
    assert out2.shape == (B2, num_classes)
    assert jnp.allclose(out2, _reference(x2, params), atol=1e-4, rtol=1e-4)

    print("KERNEL_OK")
</pallas_src>

<mosaic_0001>
module attributes {stable_mosaic.version = 11 : i64} {
  func.func @_cytokine_kernel(%arg0: i32, %arg1: memref<8x32xf32, #tpu.memory_space<vmem>>, %arg2: memref<32x128xf32, #tpu.memory_space<vmem>>, %arg3: memref<1x128xf32, #tpu.memory_space<vmem>>, %arg4: memref<128x64xf32, #tpu.memory_space<vmem>>, %arg5: memref<1x64xf32, #tpu.memory_space<vmem>>, %arg6: memref<64x32xf32, #tpu.memory_space<vmem>>, %arg7: memref<1x32xf32, #tpu.memory_space<vmem>>, %arg8: memref<32x128xf32, #tpu.memory_space<vmem>>, %arg9: memref<1x128xf32, #tpu.memory_space<vmem>>, %arg10: memref<8x128xf32, #tpu.memory_space<vmem>>) attributes {dimension_semantics = [#tpu.dimension_semantics<parallel>], iteration_bounds = array<i64: 2>, scalar_prefetch = 0 : i64, scratch_operands = 0 : i64, tpu.core_type = #tpu.core_type<tc>, window_params = [{transform_indices = @transform_0, window_bounds = array<i64: 8, 32>}, {pipeline_mode = #tpu.pipeline_mode<synchronous>, transform_indices = @transform_1, window_bounds = array<i64: 32, 128>}, {pipeline_mode = #tpu.pipeline_mode<synchronous>, transform_indices = @transform_2, window_bounds = array<i64: 1, 128>}, {pipeline_mode = #tpu.pipeline_mode<synchronous>, transform_indices = @transform_3, window_bounds = array<i64: 128, 64>}, {pipeline_mode = #tpu.pipeline_mode<synchronous>, transform_indices = @transform_4, window_bounds = array<i64: 1, 64>}, {pipeline_mode = #tpu.pipeline_mode<synchronous>, transform_indices = @transform_5, window_bounds = array<i64: 64, 32>}, {pipeline_mode = #tpu.pipeline_mode<synchronous>, transform_indices = @transform_6, window_bounds = array<i64: 1, 32>}, {pipeline_mode = #tpu.pipeline_mode<synchronous>, transform_indices = @transform_7, window_bounds = array<i64: 32, 128>}, {pipeline_mode = #tpu.pipeline_mode<synchronous>, transform_indices = @transform_8, window_bounds = array<i64: 1, 128>}, {transform_indices = @transform_9, window_bounds = array<i64: 8, 128>}]} {
    %c0 = arith.constant 0 : index
    %c0_0 = arith.constant 0 : index
    %0 = vector.load %arg1[%c0, %c0_0] : memref<8x32xf32, #tpu.memory_space<vmem>>, vector<8x32xf32>
    %c0_1 = arith.constant 0 : index
    %c0_2 = arith.constant 0 : index
    %1 = vector.load %arg2[%c0_1, %c0_2] : memref<32x128xf32, #tpu.memory_space<vmem>>, vector<32x128xf32>
    %cst = arith.constant dense<0.000000e+00> : vector<8x128xf32>
    %2 = tpu.matmul %0, %1, %cst {dimension_numbers = #tpu.dot_dimension_numbers<[1], [0], [0], [1], [0, 0, 1, 1], [], []>} : vector<8x32xf32>, vector<32x128xf32>, vector<8x128xf32> -> vector<8x128xf32>
    %c0_3 = arith.constant 0 : index
    %c0_4 = arith.constant 0 : index
    %3 = vector.load %arg3[%c0_3, %c0_4] : memref<1x128xf32, #tpu.memory_space<vmem>>, vector<1x128xf32>
    %4 = vector.broadcast %3 : vector<1x128xf32> to vector<8x128xf32>
    %5 = arith.addf %2, %4 : vector<8x128xf32>
    %cst_5 = arith.constant 0.000000e+00 : f32
    %6 = vector.broadcast %cst_5 : f32 to vector<8x128xf32>
    %7 = arith.maximumf %5, %6 : vector<8x128xf32>
    %cst_6 = arith.constant dense<0.000000e+00> : vector<8xf32>
    %8 = vector.multi_reduction <add>, %7, %cst_6 [1] : vector<8x128xf32> to vector<8xf32>
    %9 = vector.shape_cast %8 : vector<8xf32> to vector<8x1xf32>
    %10 = arith.mulf %7, %7 : vector<8x128xf32>
    %cst_7 = arith.constant dense<0.000000e+00> : vector<8xf32>
    %11 = vector.multi_reduction <add>, %10, %cst_7 [1] : vector<8x128xf32> to vector<8xf32>
    %12 = vector.shape_cast %11 : vector<8xf32> to vector<8x1xf32>
    %cst_8 = arith.constant 7.812500e-03 : f32
    %13 = vector.broadcast %cst_8 : f32 to vector<8x1xf32>
    %14 = arith.mulf %9, %13 : vector<8x1xf32>
    %cst_9 = arith.constant 7.812500e-03 : f32
    %15 = vector.broadcast %cst_9 : f32 to vector<8x1xf32>
    %16 = arith.mulf %12, %15 : vector<8x1xf32>
    %17 = arith.mulf %14, %14 : vector<8x1xf32>
    %18 = arith.subf %16, %17 : vector<8x1xf32>
    %cst_10 = arith.constant 0.000000e+00 : f32
    %19 = vector.broadcast %cst_10 : f32 to vector<8x1xf32>
    %20 = arith.maximumf %18, %19 : vector<8x1xf32>
    %21 = vector.broadcast %14 : vector<8x1xf32> to vector<8x128xf32>
    %22 = arith.subf %7, %21 : vector<8x128xf32>
    %cst_11 = arith.constant 9.99999974E-6 : f32
    %23 = vector.broadcast %cst_11 : f32 to vector<8x1xf32>
    %24 = arith.addf %20, %23 : vector<8x1xf32>
    %25 = math.rsqrt %24 : vector<8x1xf32>
    %26 = vector.broadcast %25 : vector<8x1xf32> to vector<8x128xf32>
    %27 = arith.mulf %22, %26 : vector<8x128xf32>
    %c0_12 = arith.constant 0 : index
    %c0_13 = arith.constant 0 : index
    %28 = vector.load %arg4[%c0_12, %c0_13] : memref<128x64xf32, #tpu.memory_space<vmem>>, vector<128x64xf32>
    %cst_14 = arith.constant dense<0.000000e+00> : vector<8x64xf32>
    %29 = tpu.matmul %27, %28, %cst_14 {dimension_numbers = #tpu.dot_dimension_numbers<[1], [0], [0], [1], [0, 0, 1, 1], [], []>} : vector<8x128xf32>, vector<128x64xf32>, vector<8x64xf32> -> vector<8x64xf32>
    %c0_15 = arith.constant 0 : index
    %c0_16 = arith.constant 0 : index
    %30 = vector.load %arg5[%c0_15, %c0_16] : memref<1x64xf32, #tpu.memory_space<vmem>>, vector<1x64xf32>
    %31 = vector.broadcast %30 : vector<1x64xf32> to vector<8x64xf32>
    %32 = arith.addf %29, %31 : vector<8x64xf32>
    %cst_17 = arith.constant 0.000000e+00 : f32
    %33 = vector.broadcast %cst_17 : f32 to vector<8x64xf32>
    %34 = arith.maximumf %32, %33 : vector<8x64xf32>
    %cst_18 = arith.constant dense<0.000000e+00> : vector<8xf32>
    %35 = vector.multi_reduction <add>, %34, %cst_18 [1] : vector<8x64xf32> to vector<8xf32>
    %36 = vector.shape_cast %35 : vector<8xf32> to vector<8x1xf32>
    %37 = arith.mulf %34, %34 : vector<8x64xf32>
    %cst_19 = arith.constant dense<0.000000e+00> : vector<8xf32>
    %38 = vector.multi_reduction <add>, %37, %cst_19 [1] : vector<8x64xf32> to vector<8xf32>
    %39 = vector.shape_cast %38 : vector<8xf32> to vector<8x1xf32>
    %cst_20 = arith.constant 1.562500e-02 : f32
    %40 = vector.broadcast %cst_20 : f32 to vector<8x1xf32>
    %41 = arith.mulf %36, %40 : vector<8x1xf32>
    %cst_21 = arith.constant 1.562500e-02 : f32
    %42 = vector.broadcast %cst_21 : f32 to vector<8x1xf32>
    %43 = arith.mulf %39, %42 : vector<8x1xf32>
    %44 = arith.mulf %41, %41 : vector<8x1xf32>
    %45 = arith.subf %43, %44 : vector<8x1xf32>
    %cst_22 = arith.constant 0.000000e+00 : f32
    %46 = vector.broadcast %cst_22 : f32 to vector<8x1xf32>
    %47 = arith.maximumf %45, %46 : vector<8x1xf32>
    %48 = vector.broadcast %41 : vector<8x1xf32> to vector<8x64xf32>
    %49 = arith.subf %34, %48 : vector<8x64xf32>
    %cst_23 = arith.constant 9.99999974E-6 : f32
    %50 = vector.broadcast %cst_23 : f32 to vector<8x1xf32>
    %51 = arith.addf %47, %50 : vector<8x1xf32>
    %52 = math.rsqrt %51 : vector<8x1xf32>
    %53 = vector.broadcast %52 : vector<8x1xf32> to vector<8x64xf32>
    %54 = arith.mulf %49, %53 : vector<8x64xf32>
    %c0_24 = arith.constant 0 : index
    %c0_25 = arith.constant 0 : index
    %55 = vector.load %arg6[%c0_24, %c0_25] : memref<64x32xf32, #tpu.memory_space<vmem>>, vector<64x32xf32>
    %cst_26 = arith.constant dense<0.000000e+00> : vector<8x32xf32>
    %56 = tpu.matmul %54, %55, %cst_26 {dimension_numbers = #tpu.dot_dimension_numbers<[1], [0], [0], [1], [0, 0, 1, 1], [], []>} : vector<8x64xf32>, vector<64x32xf32>, vector<8x32xf32> -> vector<8x32xf32>
    %c0_27 = arith.constant 0 : index
    %c0_28 = arith.constant 0 : index
    %57 = vector.load %arg7[%c0_27, %c0_28] : memref<1x32xf32, #tpu.memory_space<vmem>>, vector<1x32xf32>
    %58 = vector.broadcast %57 : vector<1x32xf32> to vector<8x32xf32>
    %59 = arith.addf %56, %58 : vector<8x32xf32>
    %cst_29 = arith.constant 0.000000e+00 : f32
    %60 = vector.broadcast %cst_29 : f32 to vector<8x32xf32>
    %61 = arith.maximumf %59, %60 : vector<8x32xf32>
    %cst_30 = arith.constant dense<0.000000e+00> : vector<8xf32>
    %62 = vector.multi_reduction <add>, %61, %cst_30 [1] : vector<8x32xf32> to vector<8xf32>
    %63 = vector.shape_cast %62 : vector<8xf32> to vector<8x1xf32>
    %64 = arith.mulf %61, %61 : vector<8x32xf32>
    %cst_31 = arith.constant dense<0.000000e+00> : vector<8xf32>
    %65 = vector.multi_reduction <add>, %64, %cst_31 [1] : vector<8x32xf32> to vector<8xf32>
    %66 = vector.shape_cast %65 : vector<8xf32> to vector<8x1xf32>
    %cst_32 = arith.constant 3.125000e-02 : f32
    %67 = vector.broadcast %cst_32 : f32 to vector<8x1xf32>
    %68 = arith.mulf %63, %67 : vector<8x1xf32>
    %cst_33 = arith.constant 3.125000e-02 : f32
    %69 = vector.broadcast %cst_33 : f32 to vector<8x1xf32>
    %70 = arith.mulf %66, %69 : vector<8x1xf32>
    %71 = arith.mulf %68, %68 : vector<8x1xf32>
    %72 = arith.subf %70, %71 : vector<8x1xf32>
    %cst_34 = arith.constant 0.000000e+00 : f32
    %73 = vector.broadcast %cst_34 : f32 to vector<8x1xf32>
    %74 = arith.maximumf %72, %73 : vector<8x1xf32>
    %75 = vector.broadcast %68 : vector<8x1xf32> to vector<8x32xf32>
    %76 = arith.subf %61, %75 : vector<8x32xf32>
    %cst_35 = arith.constant 9.99999974E-6 : f32
    %77 = vector.broadcast %cst_35 : f32 to vector<8x1xf32>
    %78 = arith.addf %74, %77 : vector<8x1xf32>
    %79 = math.rsqrt %78 : vector<8x1xf32>
    %80 = vector.broadcast %79 : vector<8x1xf32> to vector<8x32xf32>
    %81 = arith.mulf %76, %80 : vector<8x32xf32>
    %c0_36 = arith.constant 0 : index
    %c0_37 = arith.constant 0 : index
    %82 = vector.load %arg8[%c0_36, %c0_37] : memref<32x128xf32, #tpu.memory_space<vmem>>, vector<32x128xf32>
    %cst_38 = arith.constant dense<0.000000e+00> : vector<8x128xf32>
    %83 = tpu.matmul %81, %82, %cst_38 {dimension_numbers = #tpu.dot_dimension_numbers<[1], [0], [0], [1], [0, 0, 1, 1], [], []>} : vector<8x32xf32>, vector<32x128xf32>, vector<8x128xf32> -> vector<8x128xf32>
    %c0_39 = arith.constant 0 : index
    %c0_40 = arith.constant 0 : index
    %84 = vector.load %arg9[%c0_39, %c0_40] : memref<1x128xf32, #tpu.memory_space<vmem>>, vector<1x128xf32>
    %85 = vector.broadcast %84 : vector<1x128xf32> to vector<8x128xf32>
    %86 = arith.addf %83, %85 : vector<8x128xf32>
    %c0_41 = arith.constant 0 : index
    %c0_42 = arith.constant 0 : index
    %87 = vector.load %arg10[%c0_41, %c0_42] : memref<8x128xf32, #tpu.memory_space<vmem>>, vector<8x128xf32>
    tpu.vector_store %arg10[%c0_41, %c0_42], %86 {strides = array<i32>} : memref<8x128xf32, #tpu.memory_space<vmem>>, vector<8x128xf32>,
    return
  }
  func.func @transform_0(%arg0: i32) -> (i32, i32) {
    %c0_i32 = arith.constant 0 : i32
    %c0_i32_0 = arith.constant 0 : i32
    return %arg0, %c0_i32 : i32, i32
  }
  func.func @transform_1(%arg0: i32) -> (i32, i32) {
    %c0_i32 = arith.constant 0 : i32
    %c0_i32_0 = arith.constant 0 : i32
    %c0_i32_1 = arith.constant 0 : i32
    return %c0_i32, %c0_i32_0 : i32, i32
  }
  func.func @transform_2(%arg0: i32) -> (i32, i32) {
    %c0_i32 = arith.constant 0 : i32
    %c0_i32_0 = arith.constant 0 : i32
    %c0_i32_1 = arith.constant 0 : i32
    return %c0_i32, %c0_i32_0 : i32, i32
  }
  func.func @transform_3(%arg0: i32) -> (i32, i32) {
    %c0_i32 = arith.constant 0 : i32
    %c0_i32_0 = arith.constant 0 : i32
    %c0_i32_1 = arith.constant 0 : i32
    return %c0_i32, %c0_i32_0 : i32, i32
  }
  func.func @transform_4(%arg0: i32) -> (i32, i32) {
    %c0_i32 = arith.constant 0 : i32
    %c0_i32_0 = arith.constant 0 : i32
    %c0_i32_1 = arith.constant 0 : i32
    return %c0_i32, %c0_i32_0 : i32, i32
  }
  func.func @transform_5(%arg0: i32) -> (i32, i32) {
    %c0_i32 = arith.constant 0 : i32
    %c0_i32_0 = arith.constant 0 : i32
    %c0_i32_1 = arith.constant 0 : i32
    return %c0_i32, %c0_i32_0 : i32, i32
  }
  func.func @transform_6(%arg0: i32) -> (i32, i32) {
    %c0_i32 = arith.constant 0 : i32
    %c0_i32_0 = arith.constant 0 : i32
    %c0_i32_1 = arith.constant 0 : i32
    return %c0_i32, %c0_i32_0 : i32, i32
  }
  func.func @transform_7(%arg0: i32) -> (i32, i32) {
    %c0_i32 = arith.constant 0 : i32
    %c0_i32_0 = arith.constant 0 : i32
    %c0_i32_1 = arith.constant 0 : i32
    return %c0_i32, %c0_i32_0 : i32, i32
  }
  func.func @transform_8(%arg0: i32) -> (i32, i32) {
    %c0_i32 = arith.constant 0 : i32
    %c0_i32_0 = arith.constant 0 : i32
    %c0_i32_1 = arith.constant 0 : i32
    return %c0_i32, %c0_i32_0 : i32, i32
  }
  func.func @transform_9(%arg0: i32) -> (i32, i32) {
    %c0_i32 = arith.constant 0 : i32
    %c0_i32_0 = arith.constant 0 : i32
    return %arg0, %c0_i32 : i32, i32
  }
}

</mosaic_0001>

<llo_original>
// kernel: tpu_custom_call.1
$region0: #{tpu_custom_call.1}
  #allocation0 [shape = 'u32[]', space=smem, size = 0x4, offset = 0x4, fixed_abs, tag = 'smem constant byte address 0x4 - core index']
  #allocation1 [shape = 'u32[144,128]{1,0:T(1,128)}', space=vmem, size = 0x12000, scoped, tag = 'internal scratch']
  %s0 = inlined_call_operand.vmem [shape: f32[16,32], index: 0, kind: input, shape index: {}]
  %s1 = inlined_call_operand.vmem [shape: f32[32,128], index: 1, kind: input, shape index: {}]
  %s2 = inlined_call_operand.vmem [shape: f32[1,128], index: 2, kind: input, shape index: {}]
  %s3 = inlined_call_operand.vmem [shape: f32[128,64], index: 3, kind: input, shape index: {}]
  %s4 = inlined_call_operand.vmem [shape: f32[1,64], index: 4, kind: input, shape index: {}]
  %s5 = inlined_call_operand.vmem [shape: f32[64,32], index: 5, kind: input, shape index: {}]
  %s6 = inlined_call_operand.vmem [shape: f32[1,32], index: 6, kind: input, shape index: {}]
  %s7 = inlined_call_operand.vmem [shape: f32[32,128], index: 7, kind: input, shape index: {}]
  %s8 = inlined_call_operand.vmem [shape: f32[1,128], index: 8, kind: input, shape index: {}]
  %s9 = inlined_call_operand.hbm [shape: f32[16,128], index: 9, kind: output, shape index: {}]
  %s10 = sld [smem:[#allocation0]]
  $region69: #{tpu_custom_call.1} parent=0
    _
  %s12 = ssub.s32 1, %s10
  %s13 = scalar_select 0, %s12, %s10
  $region1: #{tpu_custom_call.1} parent=0
    #allocation2 [shape = 'u8[8192]{0}', space=vmem, size = 0x2000, scoped, tag = 'output window, operand 0']
    #allocation3 [shape = 's32[2]{0}', space=sflag, size = 0x8, scoped, tag = 'scoped memory for tpu_custom_call.1']
    %14 = vsyncpa [#allocation3], 0
    %s15 = scalar_lea.sflag [#allocation3], 1
    %16 = vsyncpa %s15, 0
    loop: start=0, step=1, limit=4
    $region2: #{tpu_custom_call.1} parent=1 // loop_pre_header
      _
    $region3: #{tpu_custom_call.1} parent=1 // loop_header
      %s18 = sphi 0, %s22
      %p19 = scmp.ge.s32.totalorder %s18, 4
      %s28 = sphi 0, %s30
      %s31 = sphi 0, %s28
      %s32 = sphi 0, %s31
      %s48 = sphi 0, %s32
      %s52 = sphi 0, %s52
      %s54 = sphi 0, %s52
      %s55 = sphi 0, %s54
      %s69 = sphi 0, %s55
      %s73 = sphi 0, %s73
      %s75 = sphi 0, %s73
      %s76 = sphi 0, %s75
      %s90 = sphi 0, %s76
      %s94 = sphi 0, %s94
      %s96 = sphi 0, %s94
      %s97 = sphi 0, %s96
      %s111 = sphi 0, %s97
      %s115 = sphi 0, %s115
      %s117 = sphi 0, %s115
      %s118 = sphi 0, %s117
      %s132 = sphi 0, %s118
      %s136 = sphi 0, %s136
      %s138 = sphi 0, %s136
      %s139 = sphi 0, %s138
      %s153 = sphi 0, %s139
      %s157 = sphi 0, %s157
      %s159 = sphi 0, %s157
      %s160 = sphi 0, %s159
      %s174 = sphi 0, %s160
      %s178 = sphi 0, %s178
      %s180 = sphi 0, %s178
      %s181 = sphi 0, %s180
      %s195 = sphi 0, %s181
      %s199 = sphi 0, %s199
      %s201 = sphi 0, %s199
      %s202 = sphi 0, %s201
      %s216 = sphi 0, %s202
      %s222 = sphi 0, %s224
      %s225 = sphi 0, %s222
      %s226 = sphi 0, %s225
      %s242 = sphi 0, %s226
    $region4: #{tpu_custom_call.1} parent=1 // loop_header_branch
      %21 = sbr.rel (%p19) target = $region8
    $region5: #{tpu_custom_call.1} parent=1 // loop_body
      %s23 = ssub.s32 %s18, 1
      %s24 = ssub.s32 %s18, 2
      %s25 = sadd.s32 %s18, 1
      %s26 = ssub.s32 %s18, %s25
      %p27 = scmp.eq.s32.totalorder %s26, 0
      %s29 = sadd.s32 %s28, 1
      %s30 = scalar_select %p27, %s28, %s29
      %p33 = pneg %p27
      %p34 = scmp.eq.s32.totalorder %s18, 1
      %p35 = por %p33, %p34
      %p36 = scmp.ne.s32.totalorder %s28, %s31
      %p37 = scmp.eq.s32.totalorder %s18, 0
      %p38 = por %p36, %p37
      %p39 = scmp.ne.s32.totalorder %s28, %s31
      %p40 = scmp.eq.s32.totalorder %s23, 1
      %p41 = por %p39, %p40
      %p42 = scmp.ne.s32.totalorder %s31, %s32
      %p43 = scmp.eq.s32.totalorder %s23, 0
      %p44 = por %p42, %p43
      %p45 = scmp.ne.s32.totalorder %s31, %s32
      %p46 = scmp.eq.s32.totalorder %s24, 1
      %p47 = por %p45, %p46
      %p49 = scmp.ne.s32.totalorder %s32, %s48
      %p50 = scmp.eq.s32.totalorder %s24, 0
      %p51 = por %p49, %p50
      %s53 = sadd.s32 %s52, 1
      %p56 = scmp.eq.s32.totalorder %s18, 1
      %p57 = scmp.ne.s32.totalorder %s52, %s54
      %p58 = scmp.eq.s32.totalorder %s18, 0
      %p59 = por %p57, %p58
      %p60 = scmp.ne.s32.totalorder %s52, %s54
      %p61 = scmp.eq.s32.totalorder %s23, 1
      %p62 = por %p60, %p61
      %p63 = scmp.ne.s32.totalorder %s54, %s55
      %p64 = scmp.eq.s32.totalorder %s23, 0
      %p65 = por %p63, %p64
      %p66 = scmp.ne.s32.totalorder %s54, %s55
      %p67 = scmp.eq.s32.totalorder %s24, 1
      %p68 = por %p66, %p67
      %p70 = scmp.ne.s32.totalorder %s55, %s69
      %p71 = scmp.eq.s32.totalorder %s24, 0
      %p72 = por %p70, %p71
      %s74 = sadd.s32 %s73, 1
      %p77 = scmp.eq.s32.totalorder %s18, 1
      %p78 = scmp.ne.s32.totalorder %s73, %s75
      %p79 = scmp.eq.s32.totalorder %s18, 0
      %p80 = por %p78, %p79
      %p81 = scmp.ne.s32.totalorder %s73, %s75
      %p82 = scmp.eq.s32.totalorder %s23, 1
      %p83 = por %p81, %p82
      %p84 = scmp.ne.s32.totalorder %s75, %s76
      %p85 = scmp.eq.s32.totalorder %s23, 0
      %p86 = por %p84, %p85
      %p87 = scmp.ne.s32.totalorder %s75, %s76
      %p88 = scmp.eq.s32.totalorder %s24, 1
      %p89 = por %p87, %p88
      %p91 = scmp.ne.s32.totalorder %s76, %s90
      %p92 = scmp.eq.s32.totalorder %s24, 0
      %p93 = por %p91, %p92
      %s95 = sadd.s32 %s94, 1
      %p98 = scmp.eq.s32.totalorder %s18, 1
      %p99 = scmp.ne.s32.totalorder %s94, %s96
      %p100 = scmp.eq.s32.totalorder %s18, 0
      %p101 = por %p99, %p100
      %p102 = scmp.ne.s32.totalorder %s94, %s96
      %p103 = scmp.eq.s32.totalorder %s23, 1
      %p104 = por %p102, %p103
      %p105 = scmp.ne.s32.totalorder %s96, %s97
      %p106 = scmp.eq.s32.totalorder %s23, 0
      %p107 = por %p105, %p106
      %p108 = scmp.ne.s32.totalorder %s96, %s97
      %p109 = scmp.eq.s32.totalorder %s24, 1
      %p110 = por %p108, %p109
      %p112 = scmp.ne.s32.totalorder %s97, %s111
      %p113 = scmp.eq.s32.totalorder %s24, 0
      %p114 = por %p112, %p113
      %s116 = sadd.s32 %s115, 1
      %p119 = scmp.eq.s32.totalorder %s18, 1
      %p120 = scmp.ne.s32.totalorder %s115, %s117
      %p121 = scmp.eq.s32.totalorder %s18, 0
      %p122 = por %p120, %p121
      %p123 = scmp.ne.s32.totalorder %s115, %s117
      %p124 = scmp.eq.s32.totalorder %s23, 1
      %p125 = por %p123, %p124
      %p126 = scmp.ne.s32.totalorder %s117, %s118
      %p127 = scmp.eq.s32.totalorder %s23, 0
      %p128 = por %p126, %p127
      %p129 = scmp.ne.s32.totalorder %s117, %s118
      %p130 = scmp.eq.s32.totalorder %s24, 1
      %p131 = por %p129, %p130
      %p133 = scmp.ne.s32.totalorder %s118, %s132
      %p134 = scmp.eq.s32.totalorder %s24, 0
      %p135 = por %p133, %p134
      %s137 = sadd.s32 %s136, 1
      %p140 = scmp.eq.s32.totalorder %s18, 1
      %p141 = scmp.ne.s32.totalorder %s136, %s138
      %p142 = scmp.eq.s32.totalorder %s18, 0
      %p143 = por %p141, %p142
      %p144 = scmp.ne.s32.totalorder %s136, %s138
      %p145 = scmp.eq.s32.totalorder %s23, 1
      %p146 = por %p144, %p145
      %p147 = scmp.ne.s32.totalorder %s138, %s139
      %p148 = scmp.eq.s32.totalorder %s23, 0
      %p149 = por %p147, %p148
      %p150 = scmp.ne.s32.totalorder %s138, %s139
      %p151 = scmp.eq.s32.totalorder %s24, 1
      %p152 = por %p150, %p151
      %p154 = scmp.ne.s32.totalorder %s139, %s153
      %p155 = scmp.eq.s32.totalorder %s24, 0
      %p156 = por %p154, %p155
      %s158 = sadd.s32 %s157, 1
      %p161 = scmp.eq.s32.totalorder %s18, 1
      %p162 = scmp.ne.s32.totalorder %s157, %s159
      %p163 = scmp.eq.s32.totalorder %s18, 0
      %p164 = por %p162, %p163
      %p165 = scmp.ne.s32.totalorder %s157, %s159
      %p166 = scmp.eq.s32.totalorder %s23, 1
      %p167 = por %p165, %p166
      %p168 = scmp.ne.s32.totalorder %s159, %s160
      %p169 = scmp.eq.s32.totalorder %s23, 0
      %p170 = por %p168, %p169
      %p171 = scmp.ne.s32.totalorder %s159, %s160
      %p172 = scmp.eq.s32.totalorder %s24, 1
      %p173 = por %p171, %p172
      %p175 = scmp.ne.s32.totalorder %s160, %s174
      %p176 = scmp.eq.s32.totalorder %s24, 0
      %p177 = por %p175, %p176
      %s179 = sadd.s32 %s178, 1
      %p182 = scmp.eq.s32.totalorder %s18, 1
      %p183 = scmp.ne.s32.totalorder %s178, %s180
      %p184 = scmp.eq.s32.totalorder %s18, 0
      %p185 = por %p183, %p184
      %p186 = scmp.ne.s32.totalorder %s178, %s180
      %p187 = scmp.eq.s32.totalorder %s23, 1
      %p188 = por %p186, %p187
      %p189 = scmp.ne.s32.totalorder %s180, %s181
      %p190 = scmp.eq.s32.totalorder %s23, 0
      %p191 = por %p189, %p190
      %p192 = scmp.ne.s32.totalorder %s180, %s181
      %p193 = scmp.eq.s32.totalorder %s24, 1
      %p194 = por %p192, %p193
      %p196 = scmp.ne.s32.totalorder %s181, %s195
      %p197 = scmp.eq.s32.totalorder %s24, 0
      %p198 = por %p196, %p197
      %s200 = sadd.s32 %s199, 1
      %p203 = scmp.eq.s32.totalorder %s18, 1
      %p204 = scmp.ne.s32.totalorder %s199, %s201
      %p205 = scmp.eq.s32.totalorder %s18, 0
      %p206 = por %p204, %p205
      %p207 = scmp.ne.s32.totalorder %s199, %s201
      %p208 = scmp.eq.s32.totalorder %s23, 1
      %p209 = por %p207, %p208
      %p210 = scmp.ne.s32.totalorder %s201, %s202
      %p211 = scmp.eq.s32.totalorder %s23, 0
      %p212 = por %p210, %p211
      %p213 = scmp.ne.s32.totalorder %s201, %s202
      %p214 = scmp.eq.s32.totalorder %s24, 1
      %p215 = por %p213, %p214
      %p217 = scmp.ne.s32.totalorder %s202, %s216
      %p218 = scmp.eq.s32.totalorder %s24, 0
      %p219 = por %p217, %p218
      %s220 = ssub.s32 %s18, %s25
      %p221 = scmp.eq.s32.totalorder %s220, 0
      %s223 = sadd.s32 %s222, 1
      %s224 = scalar_select %p221, %s222, %s223
      %p227 = pneg %p221
      %p228 = scmp.eq.s32.totalorder %s18, 1
      %p229 = por %p227, %p228
      %p230 = scmp.ne.s32.totalorder %s222, %s225
      %p231 = scmp.eq.s32.totalorder %s18, 0
      %p232 = por %p230, %p231
      %p233 = scmp.ne.s32.totalorder %s222, %s225
      %p234 = scmp.eq.s32.totalorder %s23, 1
      %p235 = por %p233, %p234
      %p236 = scmp.ne.s32.totalorder %s225, %s226
      %p237 = scmp.eq.s32.totalorder %s23, 0
      %p238 = por %p236, %p237
      %p239 = scmp.ne.s32.totalorder %s225, %s226
      %p240 = scmp.eq.s32.totalorder %s24, 1
      %p241 = por %p239, %p240
      %p243 = scmp.ne.s32.totalorder %s226, %s242
      %p244 = scmp.eq.s32.totalorder %s24, 0
      %p245 = por %p243, %p244
      %p246 = scmp.le.s32.totalorder 1, %s18
      %p247 = scmp.lt.s32.totalorder %s18, 3
      %p248 = pnand %p246, %p247
      %p249 = pneg %p248
      // Predicated region
      $region9: #{tpu_custom_call.1} parent=5 // pred_check
        _
      $region10: #{tpu_custom_call.1} parent=5 // pred_check_branch
        %251 = sbr.rel (%p248) target = $region12
      $region11: #{tpu_custom_call.1} parent=5 // pred_region
        %s252 = ssub.s32 %s18, 1
        // Predicated region
        $region13: #{tpu_custom_call.1} parent=11 // pred_check
          %p253 = pneg %p65
        $region14: #{tpu_custom_call.1} parent=11 // pred_check_branch
          %255 = sbr.rel (%p253) target = $region16
        $region15: #{tpu_custom_call.1} parent=11 // pred_region
          _
        $region16: #{tpu_custom_call.1} parent=11 // pred_fallthru
          _
        // Predicated region
        $region17: #{tpu_custom_call.1} parent=11 // pred_check
          %p256 = pneg %p86
        $region18: #{tpu_custom_call.1} parent=11 // pred_check_branch
          %258 = sbr.rel (%p256) target = $region20
        $region19: #{tpu_custom_call.1} parent=11 // pred_region
          _
        $region20: #{tpu_custom_call.1} parent=11 // pred_fallthru
          _
        // Predicated region
        $region21: #{tpu_custom_call.1} parent=11 // pred_check
          %p259 = pneg %p107
        $region22: #{tpu_custom_call.1} parent=11 // pred_check_branch
          %261 = sbr.rel (%p259) target = $region24
        $region23: #{tpu_custom_call.1} parent=11 // pred_region
          _
        $region24: #{tpu_custom_call.1} parent=11 // pred_fallthru
          _
        // Predicated region
        $region25: #{tpu_custom_call.1} parent=11 // pred_check
          %p262 = pneg %p128
        $region26: #{tpu_custom_call.1} parent=11 // pred_check_branch
          %264 = sbr.rel (%p262) target = $region28
        $region27: #{tpu_custom_call.1} parent=11 // pred_region
          _
        $region28: #{tpu_custom_call.1} parent=11 // pred_fallthru
          _
        // Predicated region
        $region29: #{tpu_custom_call.1} parent=11 // pred_check
          %p265 = pneg %p149
        $region30: #{tpu_custom_call.1} parent=11 // pred_check_branch
          %267 = sbr.rel (%p265) target = $region32
        $region31: #{tpu_custom_call.1} parent=11 // pred_region
          _
        $region32: #{tpu_custom_call.1} parent=11 // pred_fallthru
          _
        // Predicated region
        $region33: #{tpu_custom_call.1} parent=11 // pred_check
          %p268 = pneg %p170
        $region34: #{tpu_custom_call.1} parent=11 // pred_check_branch
          %270 = sbr.rel (%p268) target = $region36
        $region35: #{tpu_custom_call.1} parent=11 // pred_region
          _
        $region36: #{tpu_custom_call.1} parent=11 // pred_fallthru
          _
        // Predicated region
        $region37: #{tpu_custom_call.1} parent=11 // pred_check
          %p271 = pneg %p191
        $region38: #{tpu_custom_call.1} parent=11 // pred_check_branch
          %273 = sbr.rel (%p271) target = $region40
        $region39: #{tpu_custom_call.1} parent=11 // pred_region
          _
        $region40: #{tpu_custom_call.1} parent=11 // pred_fallthru
          _
        // Predicated region
        $region41: #{tpu_custom_call.1} parent=11 // pred_check
          %p274 = pneg %p212
        $region42: #{tpu_custom_call.1} parent=11 // pred_check_branch
          %276 = sbr.rel (%p274) target = $region44
        $region43: #{tpu_custom_call.1} parent=11 // pred_region
          _
        $region44: #{tpu_custom_call.1} parent=11 // pred_fallthru
          _
      $region12: #{tpu_custom_call.1} parent=5 // pred_fallthru
        _
      %p277 = scmp.lt.s32.totalorder %s18, 2
      // Predicated region
      $region45: #{tpu_custom_call.1} parent=5 // pred_check
        %p278 = pneg %p277
      $region46: #{tpu_custom_call.1} parent=5 // pred_check_branch
        %280 = sbr.rel (%p278) target = $region48
      $region47: #{tpu_custom_call.1} parent=5 // pred_region
        // Predicated region
        $region49: #{tpu_custom_call.1} parent=47 // pred_check
          %p281 = pneg %p38
        $region50: #{tpu_custom_call.1} parent=47 // pred_check_branch
          %283 = sbr.rel (%p281) target = $region52
        $region51: #{tpu_custom_call.1} parent=47 // pred_region
          %p284 = scmp.lt.s32.totalorder %s18, 1
          %s285 = scalar_select %p284, %s18, 1
          %s286 = smul.addr %s285, 8
          %s287 = scalar_lea.vmem %s0, %s286
        $region52: #{tpu_custom_call.1} parent=47 // pred_fallthru
          _
      $region48: #{tpu_custom_call.1} parent=5 // pred_fallthru
        _
      %p288 = scmp.le.s32.totalorder 1, %s18
      %p289 = scmp.lt.s32.totalorder %s18, 3
      %p290 = pnand %p288, %p289
      %p291 = pneg %p290
      // Predicated region
      $region53: #{tpu_custom_call.1} parent=5 // pred_check
        _
      $region54: #{tpu_custom_call.1} parent=5 // pred_check_branch
        %293 = sbr.rel (%p290) target = $region56
      $region55: #{tpu_custom_call.1} parent=5 // pred_region
        %s294 = ssub.s32 %s18, 1
        %p295 = scmp.lt.s32.totalorder %s23, 1
        %s296 = scalar_select %p295, %s23, 1
        %s297 = smul.addr %s296, 8
        %s298 = scalar_lea.vmem %s0, %s297
        %p299 = pneg %p44
        %p300 = pneg %p41
        %p301 = pneg %p65
        %p302 = pneg %p62
        %p303 = pneg %p86
        %p304 = pneg %p83
        %p305 = pneg %p107
        %p306 = pneg %p104
        %p307 = pneg %p128
        %p308 = pneg %p125
        %p309 = pneg %p149
        %p310 = pneg %p146
        %p311 = pneg %p170
        %p312 = pneg %p167
        %p313 = pneg %p191
        %p314 = pneg %p188
        %p315 = pneg %p212
        %p316 = pneg %p209
        %p317 = pneg %p238
        %p318 = pneg %p235
        %s319 = sand.u32 %s225, 1
        %s320 = scalar_lea.sflag [#allocation3], %s319
        %s321 = sand.u32 %s225, 1
        %s322 = smul.addr %s321, 8
        %s323 = scalar_lea.vmem [#allocation2], %s322
        %p324 = scmp.lt.s32.totalorder %s23, 1
        %s325 = scalar_select %p324, %s23, 1
        %s326 = smul.addr %s325, 8
        %s327 = scalar_lea.vmem %s0, %s326
        %v328 = vld [vmem:[%s327] sm:$0xff]
        %v329 = vld [vmem:[%s1] sm:$0xff]
        %v330 = vld [vmem:[%s1 + $0x8] sm:$0xff]
        %v331 = vld [vmem:[%s1 + $0x10] sm:$0xff]
        %v332 = vld [vmem:[%s1 + $0x18] sm:$0xff]
        %v333 = vld [vmem:[%s2] sm:$0x1]
        %v335 = vlaneseq
        %v336 = vshrl.u32 %v335, 7
        %v337 = vsub.s32 0, %v336
        %v338 = vrot.slane %v333, %v337
        %vm340 = vcmask 261120
        %v342 = vsel %vm340, %v328, 0
        %344 = vmatprep.subr.mxu0 0.0
        %345 = vmatpush1.msra.mxu0 0.0
        %346 = vmatprep.subr.mxu0 0.0
        %347 = vmatpush1.msra.mxu0 0.0
        %348 = vmatprep.subr.mxu0 0.0
        %349 = vmatpush1.msra.mxu0 0.0
        %350 = vmatprep.subr.mxu0 0.0
        %351 = vmatpush1.msra.mxu0 0.0
        %352 = vmatprep.subr.mxu0 0.0
        %353 = vmatpush1.msra.mxu0 0.0
        %354 = vmatprep.subr.mxu0 0.0
        %355 = vmatpush1.msra.mxu0 0.0
        %356 = vmatprep.subr.mxu0 0.0
        %357 = vmatpush1.msra.mxu0 0.0
        %358 = vmatprep.subr.mxu0 0.0
        %359 = vmatpush1.msra.mxu0 0.0
        %360 = vmatprep.subr.mxu0 0.0
        %361 = vmatpush1.msra.mxu0 0.0
        %362 = vmatprep.subr.mxu0 0.0
        %363 = vmatpush1.msra.mxu0 0.0
        %364 = vmatprep.subr.mxu0 0.0
        %365 = vmatpush1.msra.mxu0 0.0
        %366 = vmatprep.subr.mxu0 0.0
        %367 = vmatpush1.msra.mxu0 0.0
        %368 = vmatprep.subr.mxu0 0.0
        %369 = vmatpush1.msra.mxu0 %v332
        %370 = vmatprep.subr.mxu0 0.0
        %371 = vmatpush1.msra.mxu0 %v331
        %372 = vmatprep.subr.mxu0 0.0
        %373 = vmatpush1.msra.mxu0 %v330
        %374 = vmatprep.subr.mxu0 0.0
        %375 = vmatpush1.msra.mxu0 %v329
        %376 = vmatprep.subr.mxu0 0.0
        %377 = vmatpush2.msra.mxu0 0.0
        %378 = vmatprep.subr.mxu0 0.0
        %379 = vmatpush2.msra.mxu0 0.0
        %380 = vmatprep.subr.mxu0 0.0
        %381 = vmatpush2.msra.mxu0 0.0
        %382 = vmatprep.subr.mxu0 0.0
        %383 = vmatpush2.msra.mxu0 0.0
        %384 = vmatprep.subr.mxu0 0.0
        %385 = vmatpush2.msra.mxu0 0.0
        %386 = vmatprep.subr.mxu0 0.0
        %387 = vmatpush2.msra.mxu0 0.0
        %388 = vmatprep.subr.mxu0 0.0
        %389 = vmatpush2.msra.mxu0 0.0
        %390 = vmatprep.subr.mxu0 0.0
        %391 = vmatpush2.msra.mxu0 0.0
        %392 = vmatprep.subr.mxu0 0.0
        %393 = vmatpush2.msra.mxu0 0.0
        %394 = vmatprep.subr.mxu0 0.0
        %395 = vmatpush2.msra.mxu0 0.0
        %396 = vmatprep.subr.mxu0 0.0
        %397 = vmatpush2.msra.mxu0 0.0
        %398 = vmatprep.subr.mxu0 0.0
        %399 = vmatpush2.msra.mxu0 0.0
        %400 = vmatprep.subr.mxu0 0.0
        %401 = vmatpush2.msra.mxu0 0.0
        %402 = vmatprep.subr.mxu0 0.0
        %403 = vmatpush2.msra.mxu0 0.0
        %404 = vmatprep.subr.mxu0 0.0
        %405 = vmatpush2.msra.mxu0 0.0
        %406 = vmatprep.subr.mxu0 0.0
        %407 = vmatpush2.msra.mxu0 0.0
        %408 = vmatprep.mubr.f32.mxu0 0.0
        %409 = vmatmul.mubr.f32.gmra.mxu0 %v342
        %v410 = vpop.f32.mrf.mxu0
        %v411 = vadd.f32 %v338, %v410
        %v412 = vpop.f32.mrf.mxu0
        %413 = vdwg.mxu0
        %v414 = vmax.f32 %v411, 0.0
        %415 = vadd.xlane.f32.xlu0 %v414
        %v416 = vpop.xlane.xlu0 %415
        %v417 = vmul.f32 %v414, %v414
        %418 = vadd.xlane.f32.xlu0 %v417
        %v419 = vpop.xlane.xlu0 %418
        %v420 = vmul.f32 %v416, 0.0078125
        %v421 = vmul.f32 %v419, 0.0078125
        %v422 = vmul.f32 %v420, %v420
        %v423 = vsub.f32 %v421, %v422
        %v424 = vmax.f32 %v423, 0.0
        %v425 = vsub.f32 %v414, %v420
        %v426 = vadd.f32 %v424, 1e-05
        %v427 = vrsqrt.pop %v426
        %v428 = vmul.f32 %v425, %v427
        %v429 = vld [vmem:[%s3] sm:$0xff]
        %v430 = vld [vmem:[%s3 + $0x8] sm:$0xff]
        %v431 = vld [vmem:[%s3 + $0x10] sm:$0xff]
        %v432 = vld [vmem:[%s3 + $0x18] sm:$0xff]
        %v433 = vld [vmem:[%s3 + $0x20] sm:$0xff]
        %v434 = vld [vmem:[%s3 + $0x28] sm:$0xff]
        %v435 = vld [vmem:[%s3 + $0x30] sm:$0xff]
        %v436 = vld [vmem:[%s3 + $0x38] sm:$0xff]
        %v437 = vld [vmem:[%s3 + $0x40] sm:$0xff]
        %v438 = vld [vmem:[%s3 + $0x48] sm:$0xff]
        %v439 = vld [vmem:[%s3 + $0x50] sm:$0xff]
        %v440 = vld [vmem:[%s3 + $0x58] sm:$0xff]
        %v441 = vld [vmem:[%s3 + $0x60] sm:$0xff]
        %v442 = vld [vmem:[%s3 + $0x68] sm:$0xff]
        %v443 = vld [vmem:[%s3 + $0x70] sm:$0xff]
        %v444 = vld [vmem:[%s3 + $0x78] sm:$0xff]
        %v445 = vld [vmem:[%s4] sm:$0x1]
        %v447 = vlaneseq
        %v448 = vshrl.u32 %v447, 7
        %v449 = vsub.s32 0, %v448
        %v450 = vrot.slane %v445, %v449
        %452 = vmatprep.subr.mxu0 0.0
        %453 = vmatpush1.msra.mxu0 %v444
        %454 = vmatprep.subr.mxu0 0.0
        %455 = vmatpush1.msra.mxu0 %v443
        %456 = vmatprep.subr.mxu0 0.0
        %457 = vmatpush1.msra.mxu0 %v442
        %458 = vmatprep.subr.mxu0 0.0
        %459 = vmatpush1.msra.mxu0 %v441
        %460 = vmatprep.subr.mxu0 0.0
        %461 = vmatpush1.msra.mxu0 %v440
        %462 = vmatprep.subr.mxu0 0.0
        %463 = vmatpush1.msra.mxu0 %v439
        %464 = vmatprep.subr.mxu0 0.0
        %465 = vmatpush1.msra.mxu0 %v438
        %466 = vmatprep.subr.mxu0 0.0
        %467 = vmatpush1.msra.mxu0 %v437
        %468 = vmatprep.subr.mxu0 0.0
        %469 = vmatpush1.msra.mxu0 %v436
        %470 = vmatprep.subr.mxu0 0.0
        %471 = vmatpush1.msra.mxu0 %v435
        %472 = vmatprep.subr.mxu0 0.0
        %473 = vmatpush1.msra.mxu0 %v434
        %474 = vmatprep.subr.mxu0 0.0
        %475 = vmatpush1.msra.mxu0 %v433
        %476 = vmatprep.subr.mxu0 0.0
        %477 = vmatpush1.msra.mxu0 %v432
        %478 = vmatprep.subr.mxu0 0.0
        %479 = vmatpush1.msra.mxu0 %v431
        %480 = vmatprep.subr.mxu0 0.0
        %481 = vmatpush1.msra.mxu0 %v430
        %482 = vmatprep.subr.mxu0 0.0
        %483 = vmatpush1.msra.mxu0 %v429
        %484 = vmatprep.subr.mxu0 0.0
        %485 = vmatpush2.msra.mxu0 0.0
        %486 = vmatprep.subr.mxu0 0.0
        %487 = vmatpush2.msra.mxu0 0.0
        %488 = vmatprep.subr.mxu0 0.0
        %489 = vmatpush2.msra.mxu0 0.0
        %490 = vmatprep.subr.mxu0 0.0
        %491 = vmatpush2.msra.mxu0 0.0
        %492 = vmatprep.subr.mxu0 0.0
        %493 = vmatpush2.msra.mxu0 0.0
        %494 = vmatprep.subr.mxu0 0.0
        %495 = vmatpush2.msra.mxu0 0.0
        %496 = vmatprep.subr.mxu0 0.0
        %497 = vmatpush2.msra.mxu0 0.0
        %498 = vmatprep.subr.mxu0 0.0
        %499 = vmatpush2.msra.mxu0 0.0
        %500 = vmatprep.subr.mxu0 0.0
        %501 = vmatpush2.msra.mxu0 0.0
        %502 = vmatprep.subr.mxu0 0.0
        %503 = vmatpush2.msra.mxu0 0.0
        %504 = vmatprep.subr.mxu0 0.0
        %505 = vmatpush2.msra.mxu0 0.0
        %506 = vmatprep.subr.mxu0 0.0
        %507 = vmatpush2.msra.mxu0 0.0
        %508 = vmatprep.subr.mxu0 0.0
        %509 = vmatpush2.msra.mxu0 0.0
        %510 = vmatprep.subr.mxu0 0.0
        %511 = vmatpush2.msra.mxu0 0.0
        %512 = vmatprep.subr.mxu0 0.0
        %513 = vmatpush2.msra.mxu0 0.0
        %514 = vmatprep.subr.mxu0 0.0
        %515 = vmatpush2.msra.mxu0 0.0
        %516 = vmatprep.mubr.f32.mxu0 0.0
        %517 = vmatmul.mubr.f32.gmra.mxu0 %v428
        %v518 = vpop.f32.mrf.mxu0
        %v519 = vadd.f32 %v450, %v518
        %v520 = vpop.f32.mrf.mxu0
        %521 = vdwg.mxu0
        %v522 = vmax.f32 %v519, 0.0
        %vm523 = vcmask 523264
        %v524 = vsel %vm523, %v522, 0.0
        %525 = vadd.xlane.f32.xlu0 %v524
        %v526 = vpop.xlane.xlu0 %525
        %v527 = vmul.f32 %v522, %v522
        %v528 = vsel %vm523, %v527, 0.0
        %529 = vadd.xlane.f32.xlu0 %v528
        %v530 = vpop.xlane.xlu0 %529
        %v531 = vmul.f32 %v526, 0.015625
        %v532 = vmul.f32 %v530, 0.015625
        %v533 = vmul.f32 %v531, %v531
        %v534 = vsub.f32 %v532, %v533
        %v535 = vmax.f32 %v534, 0.0
        %v536 = vsub.f32 %v522, %v531
        %v537 = vadd.f32 %v535, 1e-05
        %v538 = vrsqrt.pop %v537
        %v539 = vmul.f32 %v536, %v538
        %v540 = vld [vmem:[%s5] sm:$0xff]
        %v541 = vld [vmem:[%s5 + $0x8] sm:$0xff]
        %v542 = vld [vmem:[%s5 + $0x10] sm:$0xff]
        %v543 = vld [vmem:[%s5 + $0x18] sm:$0xff]
        %v544 = vld [vmem:[%s5 + $0x20] sm:$0xff]
        %v545 = vld [vmem:[%s5 + $0x28] sm:$0xff]
        %v546 = vld [vmem:[%s5 + $0x30] sm:$0xff]
        %v547 = vld [vmem:[%s5 + $0x38] sm:$0xff]
        %v548 = vld [vmem:[%s6] sm:$0x1]
        %v550 = vlaneseq
        %v551 = vshrl.u32 %v550, 7
        %v552 = vsub.s32 0, %v551
        %v553 = vrot.slane %v548, %v552
        %v556 = vsel %vm523, %v539, 0
        %558 = vmatprep.subr.mxu0 0.0
        %559 = vmatpush1.msra.mxu0 0.0
        %560 = vmatprep.subr.mxu0 0.0
        %561 = vmatpush1.msra.mxu0 0.0
        %562 = vmatprep.subr.mxu0 0.0
        %563 = vmatpush1.msra.mxu0 0.0
        %564 = vmatprep.subr.mxu0 0.0
        %565 = vmatpush1.msra.mxu0 0.0
        %566 = vmatprep.subr.mxu0 0.0
        %567 = vmatpush1.msra.mxu0 0.0
        %568 = vmatprep.subr.mxu0 0.0
        %569 = vmatpush1.msra.mxu0 0.0
        %570 = vmatprep.subr.mxu0 0.0
        %571 = vmatpush1.msra.mxu0 0.0
        %572 = vmatprep.subr.mxu0 0.0
        %573 = vmatpush1.msra.mxu0 0.0
        %574 = vmatprep.subr.mxu0 0.0
        %575 = vmatpush1.msra.mxu0 %v547
        %576 = vmatprep.subr.mxu0 0.0
        %577 = vmatpush1.msra.mxu0 %v546
        %578 = vmatprep.subr.mxu0 0.0
        %579 = vmatpush1.msra.mxu0 %v545
        %580 = vmatprep.subr.mxu0 0.0
        %581 = vmatpush1.msra.mxu0 %v544
        %582 = vmatprep.subr.mxu0 0.0
        %583 = vmatpush1.msra.mxu0 %v543
        %584 = vmatprep.subr.mxu0 0.0
        %585 = vmatpush1.msra.mxu0 %v542
        %586 = vmatprep.subr.mxu0 0.0
        %587 = vmatpush1.msra.mxu0 %v541
        %588 = vmatprep.subr.mxu0 0.0
        %589 = vmatpush1.msra.mxu0 %v540
        %590 = vmatprep.subr.mxu0 0.0
        %591 = vmatpush2.msra.mxu0 0.0
        %592 = vmatprep.subr.mxu0 0.0
        %593 = vmatpush2.msra.mxu0 0.0
        %594 = vmatprep.subr.mxu0 0.0
        %595 = vmatpush2.msra.mxu0 0.0
        %596 = vmatprep.subr.mxu0 0.0
        %597 = vmatpush2.msra.mxu0 0.0
        %598 = vmatprep.subr.mxu0 0.0
        %599 = vmatpush2.msra.mxu0 0.0
        %600 = vmatprep.subr.mxu0 0.0
        %601 = vmatpush2.msra.mxu0 0.0
        %602 = vmatprep.subr.mxu0 0.0
        %603 = vmatpush2.msra.mxu0 0.0
        %604 = vmatprep.subr.mxu0 0.0
        %605 = vmatpush2.msra.mxu0 0.0
        %606 = vmatprep.subr.mxu0 0.0
        %607 = vmatpush2.msra.mxu0 0.0
        %608 = vmatprep.subr.mxu0 0.0
        %609 = vmatpush2.msra.mxu0 0.0
        %610 = vmatprep.subr.mxu0 0.0
        %611 = vmatpush2.msra.mxu0 0.0
        %612 = vmatprep.subr.mxu0 0.0
        %613 = vmatpush2.msra.mxu0 0.0
        %614 = vmatprep.subr.mxu0 0.0
        %615 = vmatpush2.msra.mxu0 0.0
        %616 = vmatprep.subr.mxu0 0.0
        %617 = vmatpush2.msra.mxu0 0.0
        %618 = vmatprep.subr.mxu0 0.0
        %619 = vmatpush2.msra.mxu0 0.0
        %620 = vmatprep.subr.mxu0 0.0
        %621 = vmatpush2.msra.mxu0 0.0
        %622 = vmatprep.mubr.f32.mxu0 0.0
        %623 = vmatmul.mubr.f32.gmra.mxu0 %v556
        %v624 = vpop.f32.mrf.mxu0
        %v625 = vadd.f32 %v553, %v624
        %v626 = vpop.f32.mrf.mxu0
        %627 = vdwg.mxu0
        %v628 = vmax.f32 %v625, 0.0
        %v629 = vsel %vm340, %v628, 0.0
        %630 = vadd.xlane.f32.xlu0 %v629
        %v631 = vpop.xlane.xlu0 %630
        %v632 = vmul.f32 %v628, %v628
        %v633 = vsel %vm340, %v632, 0.0
        %634 = vadd.xlane.f32.xlu0 %v633
        %v635 = vpop.xlane.xlu0 %634
        %v636 = vmul.f32 %v631, 0.03125
        %v637 = vmul.f32 %v635, 0.03125
        %v638 = vmul.f32 %v636, %v636
        %v639 = vsub.f32 %v637, %v638
        %v640 = vmax.f32 %v639, 0.0
        %v641 = vsub.f32 %v628, %v636
        %v642 = vadd.f32 %v640, 1e-05
        %v643 = vrsqrt.pop %v642
        %v644 = vmul.f32 %v641, %v643
        %v645 = vld [vmem:[%s7] sm:$0xff]
        %v646 = vld [vmem:[%s7 + $0x8] sm:$0xff]
        %v647 = vld [vmem:[%s7 + $0x10] sm:$0xff]
        %v648 = vld [vmem:[%s7 + $0x18] sm:$0xff]
        %v649 = vld [vmem:[%s8] sm:$0x1]
        %v651 = vlaneseq
        %v652 = vshrl.u32 %v651, 7
        %v653 = vsub.s32 0, %v652
        %v654 = vrot.slane %v649, %v653
        %v657 = vsel %vm340, %v644, 0
        %659 = vmatprep.subr.mxu0 0.0
        %660 = vmatpush1.msra.mxu0 0.0
        %661 = vmatprep.subr.mxu0 0.0
        %662 = vmatpush1.msra.mxu0 0.0
        %663 = vmatprep.subr.mxu0 0.0
        %664 = vmatpush1.msra.mxu0 0.0
        %665 = vmatprep.subr.mxu0 0.0
        %666 = vmatpush1.msra.mxu0 0.0
        %667 = vmatprep.subr.mxu0 0.0
        %668 = vmatpush1.msra.mxu0 0.0
        %669 = vmatprep.subr.mxu0 0.0
        %670 = vmatpush1.msra.mxu0 0.0
        %671 = vmatprep.subr.mxu0 0.0
        %672 = vmatpush1.msra.mxu0 0.0
        %673 = vmatprep.subr.mxu0 0.0
        %674 = vmatpush1.msra.mxu0 0.0
        %675 = vmatprep.subr.mxu0 0.0
        %676 = vmatpush1.msra.mxu0 0.0
        %677 = vmatprep.subr.mxu0 0.0
        %678 = vmatpush1.msra.mxu0 0.0
        %679 = vmatprep.subr.mxu0 0.0
        %680 = vmatpush1.msra.mxu0 0.0
        %681 = vmatprep.subr.mxu0 0.0
        %682 = vmatpush1.msra.mxu0 0.0
        %683 = vmatprep.subr.mxu0 0.0
        %684 = vmatpush1.msra.mxu0 %v648
        %685 = vmatprep.subr.mxu0 0.0
        %686 = vmatpush1.msra.mxu0 %v647
        %687 = vmatprep.subr.mxu0 0.0
        %688 = vmatpush1.msra.mxu0 %v646
        %689 = vmatprep.subr.mxu0 0.0
        %690 = vmatpush1.msra.mxu0 %v645
        %691 = vmatprep.subr.mxu0 0.0
        %692 = vmatpush2.msra.mxu0 0.0
        %693 = vmatprep.subr.mxu0 0.0
        %694 = vmatpush2.msra.mxu0 0.0
        %695 = vmatprep.subr.mxu0 0.0
        %696 = vmatpush2.msra.mxu0 0.0
        %697 = vmatprep.subr.mxu0 0.0
        %698 = vmatpush2.msra.mxu0 0.0
        %699 = vmatprep.subr.mxu0 0.0
        %700 = vmatpush2.msra.mxu0 0.0
        %701 = vmatprep.subr.mxu0 0.0
        %702 = vmatpush2.msra.mxu0 0.0
        %703 = vmatprep.subr.mxu0 0.0
        %704 = vmatpush2.msra.mxu0 0.0
        %705 = vmatprep.subr.mxu0 0.0
        %706 = vmatpush2.msra.mxu0 0.0
        %707 = vmatprep.subr.mxu0 0.0
        %708 = vmatpush2.msra.mxu0 0.0
        %709 = vmatprep.subr.mxu0 0.0
        %710 = vmatpush2.msra.mxu0 0.0
        %711 = vmatprep.subr.mxu0 0.0
        %712 = vmatpush2.msra.mxu0 0.0
        %713 = vmatprep.subr.mxu0 0.0
        %714 = vmatpush2.msra.mxu0 0.0
        %715 = vmatprep.subr.mxu0 0.0
        %716 = vmatpush2.msra.mxu0 0.0
        %717 = vmatprep.subr.mxu0 0.0
        %718 = vmatpush2.msra.mxu0 0.0
        %719 = vmatprep.subr.mxu0 0.0
        %720 = vmatpush2.msra.mxu0 0.0
        %721 = vmatprep.subr.mxu0 0.0
        %722 = vmatpush2.msra.mxu0 0.0
        %723 = vmatprep.mubr.f32.mxu0 0.0
        %724 = vmatmul.mubr.f32.gmra.mxu0 %v657
        %v725 = vpop.f32.mrf.mxu0
        %v726 = vadd.f32 %v654, %v725
        %v727 = vpop.f32.mrf.mxu0
        %728 = vdwg.mxu0
        %729 = vst [vmem:[%s323] sm:$0xff] %v726
        %s730 = sand.u32 %s225, 1
        %s731 = scalar_lea.sflag [#allocation3], %s730
        %s732 = sand.u32 %s225, 1
        %s733 = smul.addr %s732, 8
        %s734 = scalar_lea.vmem [#allocation2], %s733
        // Predicated region
        $region57: #{tpu_custom_call.1} parent=55 // pred_check
          %p735 = pneg %p235
        $region58: #{tpu_custom_call.1} parent=55 // pred_check_branch
          %737 = sbr.rel (%p735) target = $region60
        $region59: #{tpu_custom_call.1} parent=55 // pred_region
          %s739 = ssub.s32 128, 128
          %740 = vsyncadd %s731, %s739
          %s741 = smul.addr %s23, 128
          %s742 = scalar_lea.hbm %s9, %s741
          %s744 = sshll.u32 %s734, 4
          %s745 = int_to_ptr.vmem [resolvable:$true] %s744
          %747 = dma.vmem_to_hbm [thread:$0]  %s745, 128, %s742, %s731
        $region60: #{tpu_custom_call.1} parent=55 // pred_fallthru
          _
      $region56: #{tpu_custom_call.1} parent=5 // pred_fallthru
        _
      %p748 = scmp.le.s32.totalorder 2, %s18
      // Predicated region
      $region61: #{tpu_custom_call.1} parent=5 // pred_check
        %p749 = pneg %p748
      $region62: #{tpu_custom_call.1} parent=5 // pred_check_branch
        %751 = sbr.rel (%p749) target = $region64
      $region63: #{tpu_custom_call.1} parent=5 // pred_region
        %s752 = ssub.s32 %s18, 2
        // Predicated region
        $region65: #{tpu_custom_call.1} parent=63 // pred_check
          %p753 = pneg %p241
        $region66: #{tpu_custom_call.1} parent=63 // pred_check_branch
          %755 = sbr.rel (%p753) target = $region68
        $region67: #{tpu_custom_call.1} parent=63 // pred_region
          %s756 = sand.u32 %s226, 1
          %s757 = scalar_lea.sflag [#allocation3], %s756
          %s758 = sand.u32 %s226, 1
          %s759 = smul.addr %s758, 8
          %s760 = scalar_lea.vmem [#allocation2], %s759
          %761 = dma.done %s757, 128
        $region68: #{tpu_custom_call.1} parent=63 // pred_fallthru
          _
      $region64: #{tpu_custom_call.1} parent=5 // pred_fallthru
        _
    $region6: #{tpu_custom_call.1} parent=1 // loop_footer
      %s22 = sadd.s32 1, %s18
    $region7: #{tpu_custom_call.1} parent=1 // loop_footer_branch
      %17 = sbr.rel target = $region3
    $region8: #{tpu_custom_call.1} parent=1 // loop_exit
      _
    %762 = vsyncpa [#allocation3], 1
    %s763 = scalar_lea.sflag [#allocation3], 1
    %764 = vsyncpa %s763, 1

</llo_original>
